<compile_context>
chip_gen: v5e
topology: v5e:2x2
jax: 0.10.0
libtpu: 0.0.40
codegen_flags: <defaults>
</compile_context>

<pallas_src>
import functools

import jax
import jax.numpy as jnp
from jax.experimental import pallas as pl
from jax.experimental.pallas import tpu as pltpu


# ----------------------------- tiling helpers ------------------------------

_MAX_TD = 2048   # lanes per tile    (multiple of 128); 512x2048 f32 = 4 MiB
_MAX_TB = 512    # sublanes per tile (multiple of 8)


def _pick_tiles(b, d):
    """Tile sizes for a (b, d) elementwise problem.

    * Respects the (8,128)-or-full-dim rule.
    * Targets ~4 MiB f32 tiles: this kernel family is pure HBM-bandwidth bound
      and the ~0.35 us per-grid-step overhead must be amortized (matters most
      on v7x's 3.2 TB/s HBM).
    * If both dims fit in one tile, cleanly splits one axis so a "parallel"
      grid axis has >= 2 blocks and v7x's two TensorCores both get work.
    """
    td = d if d <= _MAX_TD else _MAX_TD
    tb = b if b <= _MAX_TB else _MAX_TB
    if td == d and tb == b:                         # grid would be (1, 1)
        if d >= 256 and d % 256 == 0:
            td = d // 2                             # lane dim stays a x128 multiple
        elif b >= 16 and b % 16 == 0:
            tb = b // 2                             # sublane dim stays a x8 multiple
    return tb, td


def _compiler_params(semantics, vmem_bytes_needed):
    """Explicit VMEM budget: raises v5e's 16 MiB scoped default when large
    tiles are chosen, and stays safely under v7x's 64 MiB physical VMEM."""
    need = int(vmem_bytes_needed) + (2 << 20)              # headroom
    limit = int(min(max(need, 16 << 20), 60 << 20))
    return pltpu.CompilerParams(
        dimension_semantics=semantics, vmem_limit_bytes=limit)


# ----------------------------- per-step kernel -----------------------------

def _add_kernel(mem_ref, delta_ref, out_ref):
    # mem_ref is (1, td) (broadcast over the batch tile) or (tb, td).
    # Accumulate in f32 on the VPU regardless of I/O dtype so the per-step and
    # fused-sequence paths stay numerically consistent.
    out_ref[...] = (mem_ref[...].astype(jnp.float32)
                    + delta_ref[...].astype(jnp.float32)).astype(out_ref.dtype)


@jax.jit
def _integrate_broadcast(mem2d, delta):
    """First step: (1, D) state broadcast-added to (B, D) deltas."""
    B, D = delta.shape
    tb, td = _pick_tiles(B, D)
    grid = (pl.cdiv(B, tb), pl.cdiv(D, td))
    isz = delta.dtype.itemsize
    tile = tb * td * isz
    return pl.pallas_call(
        _add_kernel,
        out_shape=jax.ShapeDtypeStruct((B, D), delta.dtype),
        grid=grid,
        in_specs=[
            # (1, td) state tile. The feature axis j is the inner grid axis so
            # this block index changes each inner step, but the tile is only
            # td*isz bytes: re-fetching it is negligible next to the delta tile.
            pl.BlockSpec((1, td), lambda i, j: (0, j)),
            pl.BlockSpec((tb, td), lambda i, j: (i, j)),
        ],
        out_specs=pl.BlockSpec((tb, td), lambda i, j: (i, j)),
        cost_estimate=pl.CostEstimate(
            flops=B * D, transcendentals=0,
            bytes_accessed=(D + 2 * B * D) * isz),
        compiler_params=_compiler_params(
            ("parallel", "parallel"),
            2 * 2 * tile + 2 * td * isz),        # delta+out double-buffered, mem tiles
    )(mem2d, delta)


@functools.partial(jax.jit, donate_argnums=(0,))
def _integrate_inplace(mem, delta):
    """Steady state: (B, D) state + (B, D) delta, accumulated in place.

    NOTE: the state buffer is donated and aliased to the output; callers must
    not keep a live external reference to the previous `mem` array."""
    B, D = delta.shape
    tb, td = _pick_tiles(B, D)
    grid = (pl.cdiv(B, tb), pl.cdiv(D, td))
    isz = delta.dtype.itemsize
    tile = tb * td * isz
    return pl.pallas_call(
        _add_kernel,
        out_shape=jax.ShapeDtypeStruct((B, D), delta.dtype),
        grid=grid,
        in_specs=[
            pl.BlockSpec((tb, td), lambda i, j: (i, j)),
            pl.BlockSpec((tb, td), lambda i, j: (i, j)),
        ],
        out_specs=pl.BlockSpec((tb, td), lambda i, j: (i, j)),
        input_output_aliases={0: 0},   # state updated in place (no extra HBM alloc)
        cost_estimate=pl.CostEstimate(
            flops=B * D, transcendentals=0, bytes_accessed=3 * B * D * isz),
        compiler_params=_compiler_params(("parallel", "parallel"), 3 * 2 * tile),
    )(mem, delta)


def integrate_step(mem, delta_mem):
    """One Integrate_Neuron.forward step (matches torch broadcasting)."""
    B, D = delta_mem.shape
    if mem.ndim == 1:
        mem = mem.reshape(1, D)
    if mem.shape[0] == 1 and B != 1:
        # TODO(synk): for D < 128 this broadcast path still stores a sub-lane-
        # width output (masked vst); folding B into lanes would need the state
        # replicated in HBM, which costs more than it saves at these sizes.
        return _integrate_broadcast(mem, delta_mem)
    # Elementwise path: if the feature axis is narrower than one lane group,
    # fold the whole problem into a single lane-dense row so stores are dense
    # vst instead of masked partial stores.
    if D < 128:
        out = _integrate_inplace(mem.reshape(1, B * D),
                                 delta_mem.reshape(1, B * D))
        return out.reshape(B, D)
    return _integrate_inplace(mem, delta_mem)


# --------------------- fused multi-timestep kernels -------------------------

def _seq_kernel(mem_ref, delta_ref, out_ref, acc_ref):
    # grid = (batch tiles, D tiles, T); T innermost ("arbitrary").
    @pl.when(pl.program_id(2) == 0)
    def _():
        acc_ref[...] = jnp.broadcast_to(
            mem_ref[...].astype(jnp.float32), acc_ref.shape)
    # Compute once into a temporary, store to both refs (no acc re-load).
    new = acc_ref[...] + delta_ref[...].astype(jnp.float32)
    acc_ref[...] = new
    out_ref[...] = new.astype(out_ref.dtype)


def _seq_final_kernel(mem_ref, delta_ref, out_ref, acc_ref):
    t = pl.program_id(2)

    @pl.when(t == 0)
    def _():
        acc_ref[...] = jnp.broadcast_to(
            mem_ref[...].astype(jnp.float32), acc_ref.shape)

    acc_ref[...] += delta_ref[...].astype(jnp.float32)

    @pl.when(t == pl.num_programs(2) - 1)
    def _():
        out_ref[...] = acc_ref[...].astype(out_ref.dtype)


@jax.jit
def integrate_sequence(mem, deltas):
    """Fused T forward() calls: deltas is (T, B, D); returns all T membrane
    states (T, B, D). The membrane lives in a VMEM f32 accumulator across the
    time axis (2*T*B*D bytes of HBM traffic vs 3*T*B*D for T in-place steps,
    plus no per-call dispatch). Prefer this over repeated integrate_step calls
    whenever the deltas are available up front."""
    T, B, D = deltas.shape
    mem2d = mem.reshape(1, D).astype(jnp.float32)
    tb, td = _pick_tiles(B, D)
    grid = (pl.cdiv(B, tb), pl.cdiv(D, td), T)
    isz = deltas.dtype.itemsize
    tile = tb * td * isz
    return pl.pallas_call(
        _seq_kernel,
        out_shape=jax.ShapeDtypeStruct((T, B, D), deltas.dtype),
        grid=grid,
        in_specs=[
            # mem block index depends only on j, so it stays resident across
            # the (inner) time axis.
            pl.BlockSpec((1, td), lambda i, j, t: (0, j)),
            pl.BlockSpec((None, tb, td), lambda i, j, t: (t, i, j)),
        ],
        out_specs=pl.BlockSpec((None, tb, td), lambda i, j, t: (t, i, j)),
        scratch_shapes=[pltpu.VMEM((tb, td), jnp.float32)],
        cost_estimate=pl.CostEstimate(
            flops=T * B * D, transcendentals=0,
            bytes_accessed=D * 4 + 2 * T * B * D * isz),
        compiler_params=_compiler_params(
            ("parallel", "parallel", "arbitrary"),
            2 * 2 * tile + tb * td * 4 + 2 * td * 4),
    )(mem2d, deltas)


@jax.jit
def integrate_final(mem, deltas):
    """Like integrate_sequence but only the FINAL membrane state (B, D) is
    written to HBM: T reads + 1 write instead of T reads + T writes (~2x at
    large T for this bandwidth-bound kernel)."""
    T, B, D = deltas.shape
    mem2d = mem.reshape(1, D).astype(jnp.float32)
    tb, td = _pick_tiles(B, D)
    grid = (pl.cdiv(B, tb), pl.cdiv(D, td), T)
    isz = deltas.dtype.itemsize
    tile = tb * td * isz
    return pl.pallas_call(
        _seq_final_kernel,
        out_shape=jax.ShapeDtypeStruct((B, D), deltas.dtype),
        grid=grid,
        in_specs=[
            pl.BlockSpec((1, td), lambda i, j, t: (0, j)),
            pl.BlockSpec((None, tb, td), lambda i, j, t: (t, i, j)),
        ],
        out_specs=pl.BlockSpec((tb, td), lambda i, j, t: (i, j)),
        scratch_shapes=[pltpu.VMEM((tb, td), jnp.float32)],
        cost_estimate=pl.CostEstimate(
            flops=T * B * D, transcendentals=0,
            bytes_accessed=D * 4 + (T + 1) * B * D * isz),
        compiler_params=_compiler_params(
            ("parallel", "parallel", "arbitrary"),
            2 * 2 * tile + tb * td * 4 + 2 * td * 4),
    )(mem2d, deltas)


# ------------------------------ module mirror -------------------------------

class IntegrateNeuron:
    """Functional JAX mirror of the stateful PyTorch Integrate_Neuron.

    If the T delta_mem tensors for a sequence are known up front, prefer
    `integrate_sequence` (all states) or `integrate_final` (last state only)
    over T forward() calls: the membrane stays resident in VMEM across the
    time axis instead of round-tripping through HBM every step."""

    def __init__(self, input_dim):
        self.input_dim = input_dim
        self.reset_mem()

    def reset_mem(self):
        self.mem = jnp.zeros((self.input_dim,), dtype=jnp.float32)

    def forward(self, delta_mem):
        self.mem = integrate_step(self.mem, delta_mem)
        return self.mem

    __call__ = forward


# ---------------------------------- demo ------------------------------------

if __name__ == "__main__":
    key = jax.random.PRNGKey(0)
    batch, input_dim, steps = 8, 256, 4   # TPU-tile-friendly small shapes

    k1, k2, k3, k4 = jax.random.split(key, 4)
    delta1 = jax.random.normal(k1, (batch, input_dim), dtype=jnp.float32)
    delta2 = jax.random.normal(k2, (batch, input_dim), dtype=jnp.float32)
    deltas = jax.random.normal(k3, (steps, batch, input_dim), dtype=jnp.float32)

    # --- per-step path (mirrors calling the torch module step by step) ---
    neuron = IntegrateNeuron(input_dim)

    mem1 = jax.block_until_ready(neuron.forward(delta1))   # (1,D) + (B,D) broadcast
    ref1 = jnp.zeros((input_dim,), jnp.float32) + delta1
    assert jnp.allclose(mem1, ref1, atol=1e-6), "step-1 mismatch"

    mem2 = jax.block_until_ready(neuron.forward(delta2))   # (B,D) + (B,D) in place
    ref2 = ref1 + delta2
    assert jnp.allclose(mem2, ref2, atol=1e-6), "step-2 mismatch"

    # --- narrow-feature (D < 128) lane-dense elementwise path ---
    d_small = 64
    mem_s = jax.random.normal(k4, (batch, d_small), dtype=jnp.float32)
    delta_s = jax.random.normal(k1, (batch, d_small), dtype=jnp.float32)
    ref_s = mem_s + delta_s
    out_s = jax.block_until_ready(integrate_step(mem_s, delta_s))
    assert jnp.allclose(out_s, ref_s, atol=1e-6), "narrow-D mismatch"

    # --- fused multi-step path (state held in VMEM across all steps) ---
    mem0 = jnp.zeros((input_dim,), jnp.float32)
    mems = jax.block_until_ready(integrate_sequence(mem0, deltas))
    ref_seq = jnp.cumsum(deltas, axis=0) + mem0[None, None, :]
    assert jnp.allclose(mems, ref_seq, atol=1e-5), "fused-sequence mismatch"

    # --- final-state-only fused path ---
    last = jax.block_until_ready(integrate_final(mem0, deltas))
    assert jnp.allclose(last, ref_seq[-1], atol=1e-5), "fused-final mismatch"

    print("KERNEL_OK")
</pallas_src>

<mosaic_0001>
module attributes {stable_mosaic.version = 11 : i64} {
  func.func @_add_kernel(%arg0: i32, %arg1: i32, %arg2: memref<1x128xf32, #tpu.memory_space<vmem>>, %arg3: memref<8x128xf32, #tpu.memory_space<vmem>>, %arg4: memref<8x128xf32, #tpu.memory_space<vmem>>) attributes {dimension_semantics = [#tpu.dimension_semantics<parallel>, #tpu.dimension_semantics<parallel>], iteration_bounds = array<i64: 1, 2>, scalar_prefetch = 0 : i64, scratch_operands = 0 : i64, tpu.core_type = #tpu.core_type<tc>, window_params = [{transform_indices = @transform_0, window_bounds = array<i64: 1, 128>}, {transform_indices = @transform_1, window_bounds = array<i64: 8, 128>}, {transform_indices = @transform_2, window_bounds = array<i64: 8, 128>}]} {
    %c0 = arith.constant 0 : index
    %c0_0 = arith.constant 0 : index
    %0 = vector.load %arg2[%c0, %c0_0] : memref<1x128xf32, #tpu.memory_space<vmem>>, vector<1x128xf32>
    %c0_1 = arith.constant 0 : index
    %c0_2 = arith.constant 0 : index
    %1 = vector.load %arg3[%c0_1, %c0_2] : memref<8x128xf32, #tpu.memory_space<vmem>>, vector<8x128xf32>
    %2 = vector.broadcast %0 : vector<1x128xf32> to vector<8x128xf32>
    %3 = arith.addf %2, %1 : vector<8x128xf32>
    %c0_3 = arith.constant 0 : index
    %c0_4 = arith.constant 0 : index
    %4 = vector.load %arg4[%c0_3, %c0_4] : memref<8x128xf32, #tpu.memory_space<vmem>>, vector<8x128xf32>
    tpu.vector_store %arg4[%c0_3, %c0_4], %3 {strides = array<i32>} : memref<8x128xf32, #tpu.memory_space<vmem>>, vector<8x128xf32>,
    return
  }
  func.func @transform_0(%arg0: i32, %arg1: i32) -> (i32, i32) {
    %c0_i32 = arith.constant 0 : i32
    %c0_i32_0 = arith.constant 0 : i32
    return %c0_i32, %arg1 : i32, i32
  }
  func.func @transform_1(%arg0: i32, %arg1: i32) -> (i32, i32) {
    %c0_i32 = arith.constant 0 : i32
    return %arg0, %arg1 : i32, i32
  }
  func.func @transform_2(%arg0: i32, %arg1: i32) -> (i32, i32) {
    %c0_i32 = arith.constant 0 : i32
    return %arg0, %arg1 : i32, i32
  }
}

</mosaic_0001>

<llo_original>
// kernel: _integrate_broadcast.1
$region0: #{_integrate_broadcast.1}
  #allocation0 [shape = 'u32[]', space=smem, size = 0x4, offset = 0x4, fixed_abs, tag = 'smem constant byte address 0x4 - core index']
  #allocation1 [shape = 'u32[72,128]{1,0:T(1,128)}', space=vmem, size = 0x9000, scoped, tag = 'internal scratch']
  %s0 = inlined_call_operand.hbm [shape: f32[1,256], index: 0, kind: input, shape index: {}]
  %s1 = inlined_call_operand.hbm [shape: f32[8,256], index: 1, kind: input, shape index: {}]
  %s2 = inlined_call_operand.hbm [shape: f32[8,256], index: 2, kind: output, shape index: {}]
  %s3 = sld [smem:[#allocation0]]
  $region49: #{_integrate_broadcast.1} parent=0
    _
  %s5 = ssub.s32 1, %s3
  %s6 = scalar_select 0, %s5, %s3
  $region1: #{_integrate_broadcast.1} parent=0
    #allocation2 [shape = 'u8[1024]{0}', space=vmem, size = 0x400, scoped, tag = 'input window, operand 0']
    #allocation3 [shape = 's32[2]{0}', space=sflag, size = 0x8, scoped, tag = 'scoped memory for _integrate_broadcast.1']
    #allocation4 [shape = 's32[2]{0}', space=sflag, size = 0x8, scoped, tag = 'scoped memory for _integrate_broadcast.1']
    #allocation5 [shape = 'u8[8192]{0}', space=vmem, size = 0x2000, scoped, tag = 'input window, operand 1']
    #allocation6 [shape = 's32[2]{0}', space=sflag, size = 0x8, scoped, tag = 'scoped memory for _integrate_broadcast.1']
    #allocation7 [shape = 'u8[8192]{0}', space=vmem, size = 0x2000, scoped, tag = 'output window, operand 0']
    %7 = vsyncpa [#allocation3], 0
    %s8 = scalar_lea.sflag [#allocation3], 1
    %9 = vsyncpa %s8, 0
    %10 = vsyncpa [#allocation6], 0
    %s11 = scalar_lea.sflag [#allocation6], 1
    %12 = vsyncpa %s11, 0
    %13 = vsyncpa [#allocation4], 0
    %s14 = scalar_lea.sflag [#allocation4], 1
    %15 = vsyncpa %s14, 0
    loop: start=0, step=1, limit=4
    $region2: #{_integrate_broadcast.1} parent=1 // loop_pre_header
      _
    $region3: #{_integrate_broadcast.1} parent=1 // loop_header
      %s17 = sphi 0, %s21
      %p18 = scmp.ge.s32.totalorder %s17, 4
      %s24 = sphi 0, %s36
      %s25 = sphi 0, %s32
      %s26 = sphi 0, %s24
      %s27 = sphi 0, %s25
      %s28 = sphi 0, %s26
      %s29 = sphi 0, %s27
      %s39 = sphi 0, %s41
      %s42 = sphi 0, %s39
      %s43 = sphi 0, %s42
      %s59 = sphi 0, %s43
      %s67 = sphi 0, %s69
      %s70 = sphi 0, %s67
      %s71 = sphi 0, %s70
      %s87 = sphi 0, %s71
      %s95 = sphi 0, %s97
      %s98 = sphi 0, %s95
      %s99 = sphi 0, %s98
      %s115 = sphi 0, %s99
    $region4: #{_integrate_broadcast.1} parent=1 // loop_header_branch
      %20 = sbr.rel (%p18) target = $region8
    $region5: #{_integrate_broadcast.1} parent=1 // loop_body
      %s22 = ssub.s32 %s17, 1
      %s23 = ssub.s32 %s17, 2
      %s30 = sadd.s32 1, %s25
      %p31 = scmp.ge.s32.totalorder %s30, 2
      %s32 = scalar_select %p31, 0, %s30
      %s33 = sadd.s32 1, %s24
      %s34 = scalar_select %p31, %s33, %s24
      %p35 = scmp.ge.s32.totalorder %s34, 1
      %s36 = scalar_select %p35, 0, %s34
      %s37 = ssub.s32 %s25, %s32
      %p38 = scmp.eq.s32.totalorder %s37, 0
      %s40 = sadd.s32 %s39, 1
      %s41 = scalar_select %p38, %s39, %s40
      %p44 = pneg %p38
      %p45 = scmp.eq.s32.totalorder %s17, 1
      %p46 = por %p44, %p45
      %p47 = scmp.ne.s32.totalorder %s39, %s42
      %p48 = scmp.eq.s32.totalorder %s17, 0
      %p49 = por %p47, %p48
      %p50 = scmp.ne.s32.totalorder %s39, %s42
      %p51 = scmp.eq.s32.totalorder %s22, 1
      %p52 = por %p50, %p51
      %p53 = scmp.ne.s32.totalorder %s42, %s43
      %p54 = scmp.eq.s32.totalorder %s22, 0
      %p55 = por %p53, %p54
      %p56 = scmp.ne.s32.totalorder %s42, %s43
      %p57 = scmp.eq.s32.totalorder %s23, 1
      %p58 = por %p56, %p57
      %p60 = scmp.ne.s32.totalorder %s43, %s59
      %p61 = scmp.eq.s32.totalorder %s23, 0
      %p62 = por %p60, %p61
      %s63 = ssub.s32 %s24, %s36
      %s64 = ssub.s32 %s25, %s32
      %s65 = sor.u32 %s63, %s64
      %p66 = scmp.eq.s32.totalorder %s65, 0
      %s68 = sadd.s32 %s67, 1
      %s69 = scalar_select %p66, %s67, %s68
      %p72 = pneg %p66
      %p73 = scmp.eq.s32.totalorder %s17, 1
      %p74 = por %p72, %p73
      %p75 = scmp.ne.s32.totalorder %s67, %s70
      %p76 = scmp.eq.s32.totalorder %s17, 0
      %p77 = por %p75, %p76
      %p78 = scmp.ne.s32.totalorder %s67, %s70
      %p79 = scmp.eq.s32.totalorder %s22, 1
      %p80 = por %p78, %p79
      %p81 = scmp.ne.s32.totalorder %s70, %s71
      %p82 = scmp.eq.s32.totalorder %s22, 0
      %p83 = por %p81, %p82
      %p84 = scmp.ne.s32.totalorder %s70, %s71
      %p85 = scmp.eq.s32.totalorder %s23, 1
      %p86 = por %p84, %p85
      %p88 = scmp.ne.s32.totalorder %s71, %s87
      %p89 = scmp.eq.s32.totalorder %s23, 0
      %p90 = por %p88, %p89
      %s91 = ssub.s32 %s24, %s36
      %s92 = ssub.s32 %s25, %s32
      %s93 = sor.u32 %s91, %s92
      %p94 = scmp.eq.s32.totalorder %s93, 0
      %s96 = sadd.s32 %s95, 1
      %s97 = scalar_select %p94, %s95, %s96
      %p100 = pneg %p94
      %p101 = scmp.eq.s32.totalorder %s17, 1
      %p102 = por %p100, %p101
      %p103 = scmp.ne.s32.totalorder %s95, %s98
      %p104 = scmp.eq.s32.totalorder %s17, 0
      %p105 = por %p103, %p104
      %p106 = scmp.ne.s32.totalorder %s95, %s98
      %p107 = scmp.eq.s32.totalorder %s22, 1
      %p108 = por %p106, %p107
      %p109 = scmp.ne.s32.totalorder %s98, %s99
      %p110 = scmp.eq.s32.totalorder %s22, 0
      %p111 = por %p109, %p110
      %p112 = scmp.ne.s32.totalorder %s98, %s99
      %p113 = scmp.eq.s32.totalorder %s23, 1
      %p114 = por %p112, %p113
      %p116 = scmp.ne.s32.totalorder %s99, %s115
      %p117 = scmp.eq.s32.totalorder %s23, 0
      %p118 = por %p116, %p117
      %p119 = scmp.le.s32.totalorder 1, %s17
      %p120 = scmp.lt.s32.totalorder %s17, 3
      %p121 = pnand %p119, %p120
      %p122 = pneg %p121
      // Predicated region
      $region9: #{_integrate_broadcast.1} parent=5 // pred_check
        _
      $region10: #{_integrate_broadcast.1} parent=5 // pred_check_branch
        %124 = sbr.rel (%p121) target = $region12
      $region11: #{_integrate_broadcast.1} parent=5 // pred_region
        %s125 = ssub.s32 %s17, 1
      $region12: #{_integrate_broadcast.1} parent=5 // pred_fallthru
        _
      %p126 = scmp.lt.s32.totalorder %s17, 2
      // Predicated region
      $region13: #{_integrate_broadcast.1} parent=5 // pred_check
        %p127 = pneg %p126
      $region14: #{_integrate_broadcast.1} parent=5 // pred_check_branch
        %129 = sbr.rel (%p127) target = $region16
      $region15: #{_integrate_broadcast.1} parent=5 // pred_region
        // Predicated region
        $region17: #{_integrate_broadcast.1} parent=15 // pred_check
          %p130 = pneg %p49
        $region18: #{_integrate_broadcast.1} parent=15 // pred_check_branch
          %132 = sbr.rel (%p130) target = $region20
        $region19: #{_integrate_broadcast.1} parent=15 // pred_region
          %s133 = sand.u32 %s39, 1
          %s134 = scalar_lea.sflag [#allocation3], %s133
          %s135 = sand.u32 %s39, 1
          %s136 = scalar_lea.vmem [#allocation2], %s135
          %138 = vsyncadd %s134, 0
          %s139 = scalar_lea.hbm %s0, %s25
          %s141 = sshll.u32 %s139, 4
          %s142 = int_to_ptr.hbm [resolvable:$true] %s141
          %s143 = sshll.u32 %s136, 4
          %s144 = int_to_ptr.vmem [resolvable:$true] %s143
          %146 = dma.hbm_to_vmem [thread:$0]  %s142, 16, %s144, %s134
        $region20: #{_integrate_broadcast.1} parent=15 // pred_fallthru
          _
        // Predicated region
        $region21: #{_integrate_broadcast.1} parent=15 // pred_check
          %p147 = pneg %p77
        $region22: #{_integrate_broadcast.1} parent=15 // pred_check_branch
          %149 = sbr.rel (%p147) target = $region24
        $region23: #{_integrate_broadcast.1} parent=15 // pred_region
          %s150 = sand.u32 %s67, 1
          %s151 = scalar_lea.sflag [#allocation6], %s150
          %s152 = sand.u32 %s67, 1
          %s153 = smul.addr %s152, 8
          %s154 = scalar_lea.vmem [#allocation5], %s153
          %156 = vsyncadd %s151, 0
          %s157 = smul.addr %s24, 2
          %s158 = sadd.s32 %s25, %s157
          %s159 = smul.addr %s158, 8
          %s160 = scalar_lea.hbm %s1, %s159
          %s162 = sshll.u32 %s160, 4
          %s163 = int_to_ptr.hbm [resolvable:$true] %s162
          %s164 = sshll.u32 %s154, 4
          %s165 = int_to_ptr.vmem [resolvable:$true] %s164
          %167 = dma.hbm_to_vmem [thread:$0]  %s163, 128, %s165, %s151
        $region24: #{_integrate_broadcast.1} parent=15 // pred_fallthru
          _
      $region16: #{_integrate_broadcast.1} parent=5 // pred_fallthru
        _
      %p168 = scmp.le.s32.totalorder 1, %s17
      %p169 = scmp.lt.s32.totalorder %s17, 3
      %p170 = pnand %p168, %p169
      %p171 = pneg %p170
      // Predicated region
      $region25: #{_integrate_broadcast.1} parent=5 // pred_check
        _
      $region26: #{_integrate_broadcast.1} parent=5 // pred_check_branch
        %173 = sbr.rel (%p170) target = $region28
      $region27: #{_integrate_broadcast.1} parent=5 // pred_region
        %s174 = ssub.s32 %s17, 1
        %s175 = sand.u32 %s42, 1
        %s176 = scalar_lea.sflag [#allocation3], %s175
        %s177 = sand.u32 %s42, 1
        %s178 = scalar_lea.vmem [#allocation2], %s177
        // Predicated region
        $region29: #{_integrate_broadcast.1} parent=27 // pred_check
          %p179 = pneg %p55
        $region30: #{_integrate_broadcast.1} parent=27 // pred_check_branch
          %181 = sbr.rel (%p179) target = $region32
        $region31: #{_integrate_broadcast.1} parent=27 // pred_region
          %183 = dma.done %s176, 16
        $region32: #{_integrate_broadcast.1} parent=27 // pred_fallthru
          _
        %s184 = sand.u32 %s70, 1
        %s185 = scalar_lea.sflag [#allocation6], %s184
        %s186 = sand.u32 %s70, 1
        %s187 = smul.addr %s186, 8
        %s188 = scalar_lea.vmem [#allocation5], %s187
        // Predicated region
        $region33: #{_integrate_broadcast.1} parent=27 // pred_check
          %p189 = pneg %p83
        $region34: #{_integrate_broadcast.1} parent=27 // pred_check_branch
          %191 = sbr.rel (%p189) target = $region36
        $region35: #{_integrate_broadcast.1} parent=27 // pred_region
          %193 = dma.done %s185, 128
        $region36: #{_integrate_broadcast.1} parent=27 // pred_fallthru
          _
        %s194 = sand.u32 %s42, 1
        %s195 = scalar_lea.sflag [#allocation3], %s194
        %s196 = sand.u32 %s42, 1
        %s197 = scalar_lea.vmem [#allocation2], %s196
        %p198 = pneg %p55
        %p199 = pneg %p52
        %s200 = sand.u32 %s70, 1
        %s201 = scalar_lea.sflag [#allocation6], %s200
        %s202 = sand.u32 %s70, 1
        %s203 = smul.addr %s202, 8
        %s204 = scalar_lea.vmem [#allocation5], %s203
        %p205 = pneg %p83
        %p206 = pneg %p80
        %p207 = pneg %p111
        %p208 = pneg %p108
        %s209 = sand.u32 %s98, 1
        %s210 = scalar_lea.sflag [#allocation4], %s209
        %s211 = sand.u32 %s98, 1
        %s212 = smul.addr %s211, 8
        %s213 = scalar_lea.vmem [#allocation7], %s212
        %v214 = vld [vmem:[%s178] sm:$0x1]
        %v215 = vld [vmem:[%s188] sm:$0xff]
        %v217 = vperm.slane %v214, 0
        %v219 = vadd.f32 %v217, %v215
        %220 = vst [vmem:[%s213] sm:$0xff] %v219
        %s221 = sand.u32 %s98, 1
        %s222 = scalar_lea.sflag [#allocation4], %s221
        %s223 = sand.u32 %s98, 1
        %s224 = smul.addr %s223, 8
        %s225 = scalar_lea.vmem [#allocation7], %s224
        // Predicated region
        $region37: #{_integrate_broadcast.1} parent=27 // pred_check
          %p226 = pneg %p108
        $region38: #{_integrate_broadcast.1} parent=27 // pred_check_branch
          %228 = sbr.rel (%p226) target = $region40
        $region39: #{_integrate_broadcast.1} parent=27 // pred_region
          %230 = vsyncadd %s222, 0
          %s231 = smul.addr %s26, 2
          %s232 = sadd.s32 %s27, %s231
          %s233 = smul.addr %s232, 8
          %s234 = scalar_lea.hbm %s2, %s233
          %s236 = sshll.u32 %s225, 4
          %s237 = int_to_ptr.vmem [resolvable:$true] %s236
          %s238 = sshll.u32 %s234, 4
          %s239 = int_to_ptr.hbm [resolvable:$true] %s238
          %241 = dma.vmem_to_hbm [thread:$0]  %s237, 128, %s239, %s222
        $region40: #{_integrate_broadcast.1} parent=27 // pred_fallthru
          _
      $region28: #{_integrate_broadcast.1} parent=5 // pred_fallthru
        _
      %p242 = scmp.le.s32.totalorder 2, %s17
      // Predicated region
      $region41: #{_integrate_broadcast.1} parent=5 // pred_check
        %p243 = pneg %p242
      $region42: #{_integrate_broadcast.1} parent=5 // pred_check_branch
        %245 = sbr.rel (%p243) target = $region44
      $region43: #{_integrate_broadcast.1} parent=5 // pred_region
        %s246 = ssub.s32 %s17, 2
        // Predicated region
        $region45: #{_integrate_broadcast.1} parent=43 // pred_check
          %p247 = pneg %p114
        $region46: #{_integrate_broadcast.1} parent=43 // pred_check_branch
          %249 = sbr.rel (%p247) target = $region48
        $region47: #{_integrate_broadcast.1} parent=43 // pred_region
          %s250 = sand.u32 %s99, 1
          %s251 = scalar_lea.sflag [#allocation4], %s250
          %s252 = sand.u32 %s99, 1
          %s253 = smul.addr %s252, 8
          %s254 = scalar_lea.vmem [#allocation7], %s253
          %256 = dma.done %s251, 128
        $region48: #{_integrate_broadcast.1} parent=43 // pred_fallthru
          _
      $region44: #{_integrate_broadcast.1} parent=5 // pred_fallthru
        _
    $region6: #{_integrate_broadcast.1} parent=1 // loop_footer
      %s21 = sadd.s32 1, %s17
    $region7: #{_integrate_broadcast.1} parent=1 // loop_footer_branch
      %16 = sbr.rel target = $region3
    $region8: #{_integrate_broadcast.1} parent=1 // loop_exit
      _
    %257 = vsyncpa [#allocation3], 1
    %s258 = scalar_lea.sflag [#allocation3], 1
    %259 = vsyncpa %s258, 1
    %260 = vsyncpa [#allocation6], 1
    %s261 = scalar_lea.sflag [#allocation6], 1
    %262 = vsyncpa %s261, 1
    %263 = vsyncpa [#allocation4], 1
    %s264 = scalar_lea.sflag [#allocation4], 1
    %265 = vsyncpa %s264, 1

</llo_original>
